<compile_context>
chip_gen: v5e
topology: v5e:2x2
jax: 0.10.0
libtpu: 0.0.40
codegen_flags: <defaults>
</compile_context>

<pallas_src>
import jax
import jax.numpy as jnp
from jax import lax
from jax.experimental import pallas as pl
from jax.experimental.pallas import tpu as pltpu

FILTER_LENGTH = 101
PAD = FILTER_LENGTH // 2          # 50
HALO = 128                        # lane-aligned halo, >= 2 * PAD


def _round_up(x, m):
    return ((x + m - 1) // m) * m


# -----------------------------------------------------------------------------
# Filter construction (plain JAX; tiny 101-element tensors).
# -----------------------------------------------------------------------------
def _blackman_window(n):
    # torch.blackman_window(n) with default periodic=True -> denominator n.
    i = jnp.arange(n, dtype=jnp.float32)
    return (0.42 - 0.5 * jnp.cos(2.0 * jnp.pi * i / n)
            + 0.08 * jnp.cos(4.0 * jnp.pi * i / n))


def _notch_filter(notch_freq, filter_width=FILTER_LENGTH, notch_width=0.05):
    pad = filter_width // 2
    inputs = jnp.arange(filter_width, dtype=jnp.float32) - pad
    notch_freq = notch_freq + notch_width

    def sinc(x):
        safe = jnp.where(x == 0.0, 1.0, x)
        return jnp.where(x == 0.0, 1.0, jnp.sin(safe) / safe)

    window = _blackman_window(filter_width)
    hlpf = sinc(3.0 * (notch_freq - notch_width) * inputs) * window
    hlpf = hlpf / jnp.sum(hlpf)
    hhpf = sinc(3.0 * (notch_freq + notch_width) * inputs) * window
    hhpf = hhpf / (-jnp.sum(hhpf))
    hhpf = hhpf.at[pad].add(1.0)
    return hlpf + hhpf


def _same_correlate(x, w):
    # out[t] = sum_k x[t + k - PAD] * w[k], zero-padded; both length 101.
    xp = jnp.pad(x, (PAD, PAD))
    t = jnp.arange(FILTER_LENGTH)
    mat = xp[t[:, None] + t[None, :]]     # [t, k]
    return mat @ w


def make_drop_filter(key, *, drop_freq_low=1e-14, drop_freq_high=1.0,
                     drop_count_low=1, drop_count_high=2, drop_width=0.05,
                     drop_prob=1.0):
    """Builds the composite 101-tap drop filter exactly as DropFreq.forward."""
    k_prob, k_count, k_freq = jax.random.split(key, 3)

    u = jax.random.uniform(k_prob, (), dtype=jnp.float32)
    drop_count = jax.random.randint(k_count, (), drop_count_low,
                                    drop_count_high + 1)
    drop_range = drop_freq_high - drop_freq_low
    freqs = (jax.random.uniform(k_freq, (drop_count_high,), dtype=jnp.float32)
             * drop_range + drop_freq_low)

    delta = jnp.zeros((FILTER_LENGTH,), jnp.float32).at[PAD].set(1.0)

    # Compose up to drop_count_high notches; select the one matching the
    # sampled drop_count (index 0 == identity delta filter).
    filt = delta
    composed = [delta]
    for i in range(drop_count_high):
        notch = _notch_filter(freqs[i], FILTER_LENGTH, drop_width)
        filt = _same_correlate(filt, notch)
        composed.append(filt)
    drop_filter = jnp.stack(composed)[drop_count]

    # drop_prob gate: a delta filter reproduces the input exactly (clone path).
    return jnp.where(u <= drop_prob, drop_filter, delta)


def _banded_weight(drop_filter, tt):
    # W[r, t] = w[r - t] for 0 <= r - t < FILTER_LENGTH, shape [tt + HALO, tt].
    r = jnp.arange(tt + HALO)[:, None]
    c = jnp.arange(tt)[None, :]
    k = r - c
    valid = (k >= 0) & (k < FILTER_LENGTH)
    w = drop_filter.astype(jnp.float32)
    return jnp.where(valid, w[jnp.clip(k, 0, FILTER_LENGTH - 1)], 0.0)


def _pick_row_block(m_rows, bb_max=256):
    """Largest multiple-of-16 row block <= bb_max with small dead-row padding."""
    m16 = _round_up(m_rows, 16)
    bb = 16
    for cand in (32, 64, 128, 256):
        if cand > bb_max:
            break
        waste = _round_up(m16, cand) - m16
        if waste <= m16 // 8:          # never inflate padded work by > ~12.5%
            bb = cand
    return min(bb, m16)


# -----------------------------------------------------------------------------
# Pallas kernel: flattened-M banded MXU matmul (bf16 in, f32 accumulate).
# -----------------------------------------------------------------------------
def _dropfreq_kernel(win_ref, w_ref, o_ref):
    acc = jnp.dot(win_ref[...], w_ref[...],
                  preferred_element_type=jnp.float32)
    o_ref[...] = acc.astype(o_ref.dtype)   # fused cast to input dtype


def apply_drop_filter_pallas(waveforms, drop_filter, *, tt=512, bb_max=256):
    """'Same' cross-correlation of [B, T] waveforms with the 101-tap filter.

    tt: time tile (lanes). Must be a multiple of 128. 512 is a good default on
    v6e/v7x; 256 trades fewer wasted band MACs on v5e.
    """
    B, T = waveforms.shape
    assert tt % HALO == 0 and tt >= HALO, "tt must be a positive multiple of 128"

    nt = -(-T // tt)                       # time tiles per row
    m = B * nt                             # flattened matmul M dimension
    bb = _pick_row_block(m, bb_max)
    m_pad = _round_up(m, bb)

    # bf16 once: MXU-native on all generations; f32 accumulation keeps the
    # 101-tap correlation well within tolerance.
    x16 = waveforms.astype(jnp.bfloat16)

    # Zero-pad time: PAD leading zeros (conv1d "same" padding) + tail slack so
    # every tile has a full 128-lane halo.
    t_total = nt * tt + HALO
    xp = jnp.pad(x16, ((0, 0), (PAD, t_total - PAD - T)))

    # Flatten (batch, time-tile) into matmul rows; each row = its tile + halo.
    main = xp[:, :nt * tt].reshape(B, nt, tt)
    halo = jnp.pad(xp[:, tt:], ((0, 0), (0, tt - HALO)))
    halo = halo.reshape(B, nt, tt)[:, :, :HALO]
    win = jnp.concatenate([main, halo], axis=-1).reshape(m, tt + HALO)
    win = jnp.pad(win, ((0, m_pad - m), (0, 0)))

    w_band = _banded_weight(drop_filter, tt).astype(jnp.bfloat16)

    # Weight block index is constant, so Pallas only DMAs it once; its VMEM
    # footprint (<=1 MiB bf16) is negligible, so no custom buffering needed.
    out = pl.pallas_call(
        _dropfreq_kernel,
        out_shape=jax.ShapeDtypeStruct((m_pad, tt), waveforms.dtype),
        grid=(m_pad // bb,),
        in_specs=[
            pl.BlockSpec((bb, tt + HALO), lambda i: (i, 0)),
            pl.BlockSpec((tt + HALO, tt), lambda i: (0, 0)),
        ],
        out_specs=pl.BlockSpec((bb, tt), lambda i: (i, 0)),
        compiler_params=pltpu.CompilerParams(
            dimension_semantics=("parallel",),
            vmem_limit_bytes=32 * 1024 * 1024,
        ),
    )(win, w_band)

    return out[:m].reshape(B, nt * tt)[:, :T]


def drop_freq_forward(waveforms, key, *, drop_freq_low=1e-14, drop_freq_high=1.0,
                      drop_count_low=1, drop_count_high=2, drop_width=0.05,
                      drop_prob=1.0, tt=512):
    """JAX/Pallas analogue of DropFreq.forward for [batch, time] inputs."""
    # TODO(synk): the [batch, time, channels>1] path is omitted (the reference
    # conv1d call with a single-channel kernel does not support it either).
    drop_filter = make_drop_filter(
        key, drop_freq_low=drop_freq_low, drop_freq_high=drop_freq_high,
        drop_count_low=drop_count_low, drop_count_high=drop_count_high,
        drop_width=drop_width, drop_prob=drop_prob)
    return apply_drop_filter_pallas(waveforms, drop_filter, tt=tt)


if __name__ == "__main__":
    key = jax.random.PRNGKey(0)
    k_wave, k_fwd = jax.random.split(key)

    B, T = 4, 2000
    waveforms = jax.random.normal(k_wave, (B, T), dtype=jnp.float32)

    drop_filter = make_drop_filter(k_fwd, drop_freq_low=1e-14, drop_freq_high=1.0,
                                   drop_count_low=1, drop_count_high=2,
                                   drop_width=0.05, drop_prob=1.0)
    out = apply_drop_filter_pallas(waveforms, drop_filter)
    out = jax.block_until_ready(out)

    assert out.shape == (B, T) and out.dtype == jnp.float32
    assert bool(jnp.all(jnp.isfinite(out)))

    # Full forward path (random draws + filter + kernel) also runs cleanly.
    out_full = jax.block_until_ready(drop_freq_forward(waveforms, k_fwd))
    assert out_full.shape == (B, T)

    # Plain-f32 reference of the same "same" correlation (VPU-only, exact f32).
    xp_ref = jnp.pad(waveforms, ((0, 0), (PAD, PAD)))
    ref = jnp.zeros_like(waveforms)
    for k in range(FILTER_LENGTH):
        ref = ref + xp_ref[:, k:k + T] * drop_filter[k]
    err = float(jnp.max(jnp.abs(out - ref)))
    assert err < 5e-2, f"max abs error {err}"

    print("KERNEL_OK")
</pallas_src>

<mosaic_0001>
module attributes {stable_mosaic.version = 11 : i64} {
  func.func @_dropfreq_kernel(%arg0: i32, %arg1: memref<16x640xbf16, #tpu.memory_space<vmem>>, %arg2: memref<640x512xbf16, #tpu.memory_space<vmem>>, %arg3: memref<16x512xf32, #tpu.memory_space<vmem>>) attributes {dimension_semantics = [#tpu.dimension_semantics<parallel>], iteration_bounds = array<i64: 1>, scalar_prefetch = 0 : i64, scratch_operands = 0 : i64, tpu.core_type = #tpu.core_type<tc>, window_params = [{transform_indices = @transform_0, window_bounds = array<i64: 16, 640>}, {pipeline_mode = #tpu.pipeline_mode<synchronous>, transform_indices = @transform_1, window_bounds = array<i64: 640, 512>}, {transform_indices = @transform_2, window_bounds = array<i64: 16, 512>}]} {
    %c0 = arith.constant 0 : index
    %c0_0 = arith.constant 0 : index
    %0 = vector.load %arg1[%c0, %c0_0] : memref<16x640xbf16, #tpu.memory_space<vmem>>, vector<16x640xbf16>
    %c0_1 = arith.constant 0 : index
    %c0_2 = arith.constant 0 : index
    %1 = vector.load %arg2[%c0_1, %c0_2] : memref<640x512xbf16, #tpu.memory_space<vmem>>, vector<640x512xbf16>
    %cst = arith.constant dense<0.000000e+00> : vector<16x512xf32>
    %2 = tpu.matmul %0, %1, %cst {dimension_numbers = #tpu.dot_dimension_numbers<[1], [0], [0], [1], [0, 0, 1, 1], [], []>} : vector<16x640xbf16>, vector<640x512xbf16>, vector<16x512xf32> -> vector<16x512xf32>
    %c0_3 = arith.constant 0 : index
    %c0_4 = arith.constant 0 : index
    %3 = vector.load %arg3[%c0_3, %c0_4] : memref<16x512xf32, #tpu.memory_space<vmem>>, vector<16x512xf32>
    tpu.vector_store %arg3[%c0_3, %c0_4], %2 {strides = array<i32>} : memref<16x512xf32, #tpu.memory_space<vmem>>, vector<16x512xf32>,
    return
  }
  func.func @transform_0(%arg0: i32) -> (i32, i32) {
    %c0_i32 = arith.constant 0 : i32
    %c0_i32_0 = arith.constant 0 : i32
    return %arg0, %c0_i32 : i32, i32
  }
  func.func @transform_1(%arg0: i32) -> (i32, i32) {
    %c0_i32 = arith.constant 0 : i32
    %c0_i32_0 = arith.constant 0 : i32
    %c0_i32_1 = arith.constant 0 : i32
    return %c0_i32, %c0_i32_0 : i32, i32
  }
  func.func @transform_2(%arg0: i32) -> (i32, i32) {
    %c0_i32 = arith.constant 0 : i32
    %c0_i32_0 = arith.constant 0 : i32
    return %arg0, %c0_i32 : i32, i32
  }
}

</mosaic_0001>

<llo_original>
// kernel: tpu_custom_call.1
$region0: #{tpu_custom_call.1}
  #allocation0 [shape = 'u32[]', space=smem, size = 0x4, offset = 0x4, fixed_abs, tag = 'smem constant byte address 0x4 - core index']
  #allocation1 [shape = 'u32[72,128]{1,0:T(1,128)}', space=vmem, size = 0x9000, scoped, tag = 'internal scratch']
  %s0 = inlined_call_operand.hbm [shape: bf16[16,640], index: 0, kind: input, shape index: {}]
  %s1 = inlined_call_operand.hbm [shape: bf16[640,512], index: 1, kind: input, shape index: {}]
  %s2 = inlined_call_operand.hbm [shape: f32[16,512], index: 2, kind: output, shape index: {}]
  %s3 = sld [smem:[#allocation0]]
  $region26: #{tpu_custom_call.1} parent=0
    _
  %s5 = ssub.s32 1, %s3
  %s6 = scalar_select 0, %s5, %s3
  $region1: #{tpu_custom_call.1} parent=0
    #allocation2 [shape = 'u8[20480]{0}', space=vmem, size = 0x5000, scoped, tag = 'input window, operand 0, single buffered']
    #allocation3 [shape = 's32[1]{0}', space=sflag, size = 0x4, scoped, tag = 'scoped memory for tpu_custom_call.1']
    #allocation4 [shape = 's32[1]{0}', space=sflag, size = 0x4, scoped, tag = 'scoped memory for tpu_custom_call.1']
    #allocation5 [shape = 'u8[655360]{0}', space=vmem, size = 0xa0000, scoped, tag = 'input window, operand 1, single buffered']
    #allocation6 [shape = 's32[1]{0}', space=sflag, size = 0x4, scoped, tag = 'scoped memory for tpu_custom_call.1']
    #allocation7 [shape = 'u8[32768]{0}', space=vmem, size = 0x8000, scoped, tag = 'output window, operand 0, single buffered']
    %7 = vsyncpa [#allocation3], 0
    %8 = vsyncpa [#allocation6], 0
    %9 = vsyncpa [#allocation4], 0
    // Predicated region
    $region2: #{tpu_custom_call.1} parent=1 // pred_check
      _
    $region3: #{tpu_custom_call.1} parent=1 // pred_check_branch
      %11 = sbr.rel (0) target = $region5
    $region4: #{tpu_custom_call.1} parent=1 // pred_region
      %13 = vsyncadd [#allocation3], 0
      %s14 = sshll.u32 %s0, 4
      %s15 = int_to_ptr.hbm [resolvable:$true] %s14
      %s16 = sshll.u32 [#allocation2], 4
      %s17 = int_to_ptr.vmem [resolvable:$true] %s16
      %22 = dma.hbm_to_vmem [thread:$0]  %s15, 640, %s17, [#allocation3], 320, 320, 20
    $region5: #{tpu_custom_call.1} parent=1 // pred_fallthru
      _
    // Predicated region
    $region6: #{tpu_custom_call.1} parent=1 // pred_check
      _
    $region7: #{tpu_custom_call.1} parent=1 // pred_check_branch
      %24 = sbr.rel (0) target = $region9
    $region8: #{tpu_custom_call.1} parent=1 // pred_region
      %26 = vsyncadd [#allocation6], 0
      %s27 = sshll.u32 %s1, 4
      %s28 = int_to_ptr.hbm [resolvable:$true] %s27
      %s29 = sshll.u32 [#allocation5], 4
      %s30 = int_to_ptr.vmem [resolvable:$true] %s29
      %35 = dma.hbm_to_vmem [thread:$0]  %s28, 20480, %s30, [#allocation6], 256, 256, 16
    $region9: #{tpu_custom_call.1} parent=1 // pred_fallthru
      _
    // Predicated region
    $region10: #{tpu_custom_call.1} parent=1 // pred_check
      _
    $region11: #{tpu_custom_call.1} parent=1 // pred_check_branch
      %37 = sbr.rel (0) target = $region13
    $region12: #{tpu_custom_call.1} parent=1 // pred_region
      %39 = dma.done [#allocation3], 640
    $region13: #{tpu_custom_call.1} parent=1 // pred_fallthru
      _
    // Predicated region
    $region14: #{tpu_custom_call.1} parent=1 // pred_check
      _
    $region15: #{tpu_custom_call.1} parent=1 // pred_check_branch
      %41 = sbr.rel (0) target = $region17
    $region16: #{tpu_custom_call.1} parent=1 // pred_region
      %43 = dma.done [#allocation6], 20480
    $region17: #{tpu_custom_call.1} parent=1 // pred_fallthru
      _
    %v44 = vld [vmem:[#allocation2] sm:$0xff]
    %v45 = vld [vmem:[#allocation2 + $0x8] sm:$0xff]
    %v46 = vld [vmem:[#allocation2 + $0x10] sm:$0xf]
    %v47 = vld [vmem:[#allocation2 + $0x14] sm:$0xff]
    %v48 = vld [vmem:[#allocation2 + $0x1c] sm:$0xff]
    %v49 = vld [vmem:[#allocation2 + $0x24] sm:$0xf]
    %v50 = vld [vmem:[#allocation5] sm:$0xff]
    %v51 = vld [vmem:[#allocation5 + $0x8] sm:$0xff]
    %v52 = vld [vmem:[#allocation5 + $0x10] sm:$0xff]
    %v53 = vld [vmem:[#allocation5 + $0x18] sm:$0xff]
    %v54 = vld [vmem:[#allocation5 + $0x20] sm:$0xff]
    %v55 = vld [vmem:[#allocation5 + $0x28] sm:$0xff]
    %v56 = vld [vmem:[#allocation5 + $0x30] sm:$0xff]
    %v57 = vld [vmem:[#allocation5 + $0x38] sm:$0xff]
    %v58 = vld [vmem:[#allocation5 + $0x40] sm:$0xff]
    %v59 = vld [vmem:[#allocation5 + $0x48] sm:$0xff]
    %v60 = vld [vmem:[#allocation5 + $0x50] sm:$0xff]
    %v61 = vld [vmem:[#allocation5 + $0x58] sm:$0xff]
    %v62 = vld [vmem:[#allocation5 + $0x60] sm:$0xff]
    %v63 = vld [vmem:[#allocation5 + $0x68] sm:$0xff]
    %v64 = vld [vmem:[#allocation5 + $0x70] sm:$0xff]
    %v65 = vld [vmem:[#allocation5 + $0x78] sm:$0xff]
    %v66 = vld [vmem:[#allocation5 + $0x80] sm:$0xff]
    %v67 = vld [vmem:[#allocation5 + $0x88] sm:$0xff]
    %v68 = vld [vmem:[#allocation5 + $0x90] sm:$0xff]
    %v69 = vld [vmem:[#allocation5 + $0x98] sm:$0xff]
    %v70 = vld [vmem:[#allocation5 + $0xa0] sm:$0xff]
    %v71 = vld [vmem:[#allocation5 + $0xa8] sm:$0xff]
    %v72 = vld [vmem:[#allocation5 + $0xb0] sm:$0xff]
    %v73 = vld [vmem:[#allocation5 + $0xb8] sm:$0xff]
    %v74 = vld [vmem:[#allocation5 + $0xc0] sm:$0xff]
    %v75 = vld [vmem:[#allocation5 + $0xc8] sm:$0xff]
    %v76 = vld [vmem:[#allocation5 + $0xd0] sm:$0xff]
    %v77 = vld [vmem:[#allocation5 + $0xd8] sm:$0xff]
    %v78 = vld [vmem:[#allocation5 + $0xe0] sm:$0xff]
    %v79 = vld [vmem:[#allocation5 + $0xe8] sm:$0xff]
    %v80 = vld [vmem:[#allocation5 + $0xf0] sm:$0xff]
    %v81 = vld [vmem:[#allocation5 + $0xf8] sm:$0xff]
    %v82 = vld [vmem:[#allocation5 + $0x100] sm:$0xff]
    %v83 = vld [vmem:[#allocation5 + $0x108] sm:$0xff]
    %v84 = vld [vmem:[#allocation5 + $0x110] sm:$0xff]
    %v85 = vld [vmem:[#allocation5 + $0x118] sm:$0xff]
    %v86 = vld [vmem:[#allocation5 + $0x120] sm:$0xff]
    %v87 = vld [vmem:[#allocation5 + $0x128] sm:$0xff]
    %v88 = vld [vmem:[#allocation5 + $0x130] sm:$0xff]
    %v89 = vld [vmem:[#allocation5 + $0x138] sm:$0xff]
    %v90 = vld [vmem:[#allocation5 + $0x140] sm:$0xff]
    %v91 = vld [vmem:[#allocation5 + $0x148] sm:$0xff]
    %v92 = vld [vmem:[#allocation5 + $0x150] sm:$0xff]
    %v93 = vld [vmem:[#allocation5 + $0x158] sm:$0xff]
    %v94 = vld [vmem:[#allocation5 + $0x160] sm:$0xff]
    %v95 = vld [vmem:[#allocation5 + $0x168] sm:$0xff]
    %v96 = vld [vmem:[#allocation5 + $0x170] sm:$0xff]
    %v97 = vld [vmem:[#allocation5 + $0x178] sm:$0xff]
    %v98 = vld [vmem:[#allocation5 + $0x180] sm:$0xff]
    %v99 = vld [vmem:[#allocation5 + $0x188] sm:$0xff]
    %v100 = vld [vmem:[#allocation5 + $0x190] sm:$0xff]
    %v101 = vld [vmem:[#allocation5 + $0x198] sm:$0xff]
    %v102 = vld [vmem:[#allocation5 + $0x1a0] sm:$0xff]
    %v103 = vld [vmem:[#allocation5 + $0x1a8] sm:$0xff]
    %v104 = vld [vmem:[#allocation5 + $0x1b0] sm:$0xff]
    %v105 = vld [vmem:[#allocation5 + $0x1b8] sm:$0xff]
    %v106 = vld [vmem:[#allocation5 + $0x1c0] sm:$0xff]
    %v107 = vld [vmem:[#allocation5 + $0x1c8] sm:$0xff]
    %v108 = vld [vmem:[#allocation5 + $0x1d0] sm:$0xff]
    %v109 = vld [vmem:[#allocation5 + $0x1d8] sm:$0xff]
    %v110 = vld [vmem:[#allocation5 + $0x1e0] sm:$0xff]
    %v111 = vld [vmem:[#allocation5 + $0x1e8] sm:$0xff]
    %v112 = vld [vmem:[#allocation5 + $0x1f0] sm:$0xff]
    %v113 = vld [vmem:[#allocation5 + $0x1f8] sm:$0xff]
    %v114 = vld [vmem:[#allocation5 + $0x200] sm:$0xff]
    %v115 = vld [vmem:[#allocation5 + $0x208] sm:$0xff]
    %v116 = vld [vmem:[#allocation5 + $0x210] sm:$0xff]
    %v117 = vld [vmem:[#allocation5 + $0x218] sm:$0xff]
    %v118 = vld [vmem:[#allocation5 + $0x220] sm:$0xff]
    %v119 = vld [vmem:[#allocation5 + $0x228] sm:$0xff]
    %v120 = vld [vmem:[#allocation5 + $0x230] sm:$0xff]
    %v121 = vld [vmem:[#allocation5 + $0x238] sm:$0xff]
    %v122 = vld [vmem:[#allocation5 + $0x240] sm:$0xff]
    %v123 = vld [vmem:[#allocation5 + $0x248] sm:$0xff]
    %v124 = vld [vmem:[#allocation5 + $0x250] sm:$0xff]
    %v125 = vld [vmem:[#allocation5 + $0x258] sm:$0xff]
    %v126 = vld [vmem:[#allocation5 + $0x260] sm:$0xff]
    %v127 = vld [vmem:[#allocation5 + $0x268] sm:$0xff]
    %v128 = vld [vmem:[#allocation5 + $0x270] sm:$0xff]
    %v129 = vld [vmem:[#allocation5 + $0x278] sm:$0xff]
    %v130 = vld [vmem:[#allocation5 + $0x280] sm:$0xff]
    %v131 = vld [vmem:[#allocation5 + $0x288] sm:$0xff]
    %v132 = vld [vmem:[#allocation5 + $0x290] sm:$0xff]
    %v133 = vld [vmem:[#allocation5 + $0x298] sm:$0xff]
    %v134 = vld [vmem:[#allocation5 + $0x2a0] sm:$0xff]
    %v135 = vld [vmem:[#allocation5 + $0x2a8] sm:$0xff]
    %v136 = vld [vmem:[#allocation5 + $0x2b0] sm:$0xff]
    %v137 = vld [vmem:[#allocation5 + $0x2b8] sm:$0xff]
    %v138 = vld [vmem:[#allocation5 + $0x2c0] sm:$0xff]
    %v139 = vld [vmem:[#allocation5 + $0x2c8] sm:$0xff]
    %v140 = vld [vmem:[#allocation5 + $0x2d0] sm:$0xff]
    %v141 = vld [vmem:[#allocation5 + $0x2d8] sm:$0xff]
    %v142 = vld [vmem:[#allocation5 + $0x2e0] sm:$0xff]
    %v143 = vld [vmem:[#allocation5 + $0x2e8] sm:$0xff]
    %v144 = vld [vmem:[#allocation5 + $0x2f0] sm:$0xff]
    %v145 = vld [vmem:[#allocation5 + $0x2f8] sm:$0xff]
    %v146 = vld [vmem:[#allocation5 + $0x300] sm:$0xff]
    %v147 = vld [vmem:[#allocation5 + $0x308] sm:$0xff]
    %v148 = vld [vmem:[#allocation5 + $0x310] sm:$0xff]
    %v149 = vld [vmem:[#allocation5 + $0x318] sm:$0xff]
    %v150 = vld [vmem:[#allocation5 + $0x320] sm:$0xff]
    %v151 = vld [vmem:[#allocation5 + $0x328] sm:$0xff]
    %v152 = vld [vmem:[#allocation5 + $0x330] sm:$0xff]
    %v153 = vld [vmem:[#allocation5 + $0x338] sm:$0xff]
    %v154 = vld [vmem:[#allocation5 + $0x340] sm:$0xff]
    %v155 = vld [vmem:[#allocation5 + $0x348] sm:$0xff]
    %v156 = vld [vmem:[#allocation5 + $0x350] sm:$0xff]
    %v157 = vld [vmem:[#allocation5 + $0x358] sm:$0xff]
    %v158 = vld [vmem:[#allocation5 + $0x360] sm:$0xff]
    %v159 = vld [vmem:[#allocation5 + $0x368] sm:$0xff]
    %v160 = vld [vmem:[#allocation5 + $0x370] sm:$0xff]
    %v161 = vld [vmem:[#allocation5 + $0x378] sm:$0xff]
    %v162 = vld [vmem:[#allocation5 + $0x380] sm:$0xff]
    %v163 = vld [vmem:[#allocation5 + $0x388] sm:$0xff]
    %v164 = vld [vmem:[#allocation5 + $0x390] sm:$0xff]
    %v165 = vld [vmem:[#allocation5 + $0x398] sm:$0xff]
    %v166 = vld [vmem:[#allocation5 + $0x3a0] sm:$0xff]
    %v167 = vld [vmem:[#allocation5 + $0x3a8] sm:$0xff]
    %v168 = vld [vmem:[#allocation5 + $0x3b0] sm:$0xff]
    %v169 = vld [vmem:[#allocation5 + $0x3b8] sm:$0xff]
    %v170 = vld [vmem:[#allocation5 + $0x3c0] sm:$0xff]
    %v171 = vld [vmem:[#allocation5 + $0x3c8] sm:$0xff]
    %v172 = vld [vmem:[#allocation5 + $0x3d0] sm:$0xff]
    %v173 = vld [vmem:[#allocation5 + $0x3d8] sm:$0xff]
    %v174 = vld [vmem:[#allocation5 + $0x3e0] sm:$0xff]
    %v175 = vld [vmem:[#allocation5 + $0x3e8] sm:$0xff]
    %v176 = vld [vmem:[#allocation5 + $0x3f0] sm:$0xff]
    %v177 = vld [vmem:[#allocation5 + $0x3f8] sm:$0xff]
    %v178 = vld [vmem:[#allocation5 + $0x400] sm:$0xff]
    %v179 = vld [vmem:[#allocation5 + $0x408] sm:$0xff]
    %v180 = vld [vmem:[#allocation5 + $0x410] sm:$0xff]
    %v181 = vld [vmem:[#allocation5 + $0x418] sm:$0xff]
    %v182 = vld [vmem:[#allocation5 + $0x420] sm:$0xff]
    %v183 = vld [vmem:[#allocation5 + $0x428] sm:$0xff]
    %v184 = vld [vmem:[#allocation5 + $0x430] sm:$0xff]
    %v185 = vld [vmem:[#allocation5 + $0x438] sm:$0xff]
    %v186 = vld [vmem:[#allocation5 + $0x440] sm:$0xff]
    %v187 = vld [vmem:[#allocation5 + $0x448] sm:$0xff]
    %v188 = vld [vmem:[#allocation5 + $0x450] sm:$0xff]
    %v189 = vld [vmem:[#allocation5 + $0x458] sm:$0xff]
    %v190 = vld [vmem:[#allocation5 + $0x460] sm:$0xff]
    %v191 = vld [vmem:[#allocation5 + $0x468] sm:$0xff]
    %v192 = vld [vmem:[#allocation5 + $0x470] sm:$0xff]
    %v193 = vld [vmem:[#allocation5 + $0x478] sm:$0xff]
    %v194 = vld [vmem:[#allocation5 + $0x480] sm:$0xff]
    %v195 = vld [vmem:[#allocation5 + $0x488] sm:$0xff]
    %v196 = vld [vmem:[#allocation5 + $0x490] sm:$0xff]
    %v197 = vld [vmem:[#allocation5 + $0x498] sm:$0xff]
    %v198 = vld [vmem:[#allocation5 + $0x4a0] sm:$0xff]
    %v199 = vld [vmem:[#allocation5 + $0x4a8] sm:$0xff]
    %v200 = vld [vmem:[#allocation5 + $0x4b0] sm:$0xff]
    %v201 = vld [vmem:[#allocation5 + $0x4b8] sm:$0xff]
    %v202 = vld [vmem:[#allocation5 + $0x4c0] sm:$0xff]
    %v203 = vld [vmem:[#allocation5 + $0x4c8] sm:$0xff]
    %v204 = vld [vmem:[#allocation5 + $0x4d0] sm:$0xff]
    %v205 = vld [vmem:[#allocation5 + $0x4d8] sm:$0xff]
    %v206 = vld [vmem:[#allocation5 + $0x4e0] sm:$0xff]
    %v207 = vld [vmem:[#allocation5 + $0x4e8] sm:$0xff]
    %v208 = vld [vmem:[#allocation5 + $0x4f0] sm:$0xff]
    %v209 = vld [vmem:[#allocation5 + $0x4f8] sm:$0xff]
    %v216 = vunpack.c.l.b16 %v44
    %v217 = vunpack.c.h.b16 %v44
    %v218 = vunpack.c.l.b16 %v45
    %v219 = vunpack.c.h.b16 %v45
    %v220 = vunpack.c.l.b16 %v46
    %v221 = vunpack.c.l.b16 %v47
    %v222 = vunpack.c.h.b16 %v47
    %v223 = vunpack.c.l.b16 %v48
    %v224 = vunpack.c.h.b16 %v48
    %v225 = vunpack.c.l.b16 %v49
    %v226 = vpack.c.b16 %v221, %v216
    %v227 = vpack.c.b16 %v222, %v217
    %v228 = vpack.c.b16 %v223, %v218
    %v229 = vpack.c.b16 %v224, %v219
    %v230 = vpack.c.b16 %v225, %v220
    %v396 = vunpack.c.l.b16 %v50
    %v397 = vunpack.c.h.b16 %v50
    %v398 = vunpack.c.l.b16 %v51
    %v399 = vunpack.c.h.b16 %v51
    %v400 = vunpack.c.l.b16 %v52
    %v401 = vunpack.c.h.b16 %v52
    %v402 = vunpack.c.l.b16 %v53
    %v403 = vunpack.c.h.b16 %v53
    %v404 = vunpack.c.l.b16 %v54
    %v405 = vunpack.c.h.b16 %v54
    %v406 = vunpack.c.l.b16 %v55
    %v407 = vunpack.c.h.b16 %v55
    %v408 = vunpack.c.l.b16 %v56
    %v409 = vunpack.c.h.b16 %v56
    %v410 = vunpack.c.l.b16 %v57
    %v411 = vunpack.c.h.b16 %v57
    %v412 = vunpack.c.l.b16 %v58
    %v413 = vunpack.c.h.b16 %v58
    %v414 = vunpack.c.l.b16 %v59
    %v415 = vunpack.c.h.b16 %v59
    %v416 = vunpack.c.l.b16 %v60
    %v417 = vunpack.c.h.b16 %v60
    %v418 = vunpack.c.l.b16 %v61
    %v419 = vunpack.c.h.b16 %v61
    %v420 = vunpack.c.l.b16 %v62
    %v421 = vunpack.c.h.b16 %v62
    %v422 = vunpack.c.l.b16 %v63
    %v423 = vunpack.c.h.b16 %v63
    %v424 = vunpack.c.l.b16 %v64
    %v425 = vunpack.c.h.b16 %v64
    %v426 = vunpack.c.l.b16 %v65
    %v427 = vunpack.c.h.b16 %v65
    %v428 = vunpack.c.l.b16 %v66
    %v429 = vunpack.c.h.b16 %v66
    %v430 = vunpack.c.l.b16 %v67
    %v431 = vunpack.c.h.b16 %v67
    %v432 = vunpack.c.l.b16 %v68
    %v433 = vunpack.c.h.b16 %v68
    %v434 = vunpack.c.l.b16 %v69
    %v435 = vunpack.c.h.b16 %v69
    %v436 = vunpack.c.l.b16 %v70
    %v437 = vunpack.c.h.b16 %v70
    %v438 = vunpack.c.l.b16 %v71
    %v439 = vunpack.c.h.b16 %v71
    %v440 = vunpack.c.l.b16 %v72
    %v441 = vunpack.c.h.b16 %v72
    %v442 = vunpack.c.l.b16 %v73
    %v443 = vunpack.c.h.b16 %v73
    %v444 = vunpack.c.l.b16 %v74
    %v445 = vunpack.c.h.b16 %v74
    %v446 = vunpack.c.l.b16 %v75
    %v447 = vunpack.c.h.b16 %v75
    %v448 = vunpack.c.l.b16 %v76
    %v449 = vunpack.c.h.b16 %v76
    %v450 = vunpack.c.l.b16 %v77
    %v451 = vunpack.c.h.b16 %v77
    %v452 = vunpack.c.l.b16 %v78
    %v453 = vunpack.c.h.b16 %v78
    %v454 = vunpack.c.l.b16 %v79
    %v455 = vunpack.c.h.b16 %v79
    %v456 = vunpack.c.l.b16 %v80
    %v457 = vunpack.c.h.b16 %v80
    %v458 = vunpack.c.l.b16 %v81
    %v459 = vunpack.c.h.b16 %v81
    %v460 = vunpack.c.l.b16 %v82
    %v461 = vunpack.c.h.b16 %v82
    %v462 = vunpack.c.l.b16 %v83
    %v463 = vunpack.c.h.b16 %v83
    %v464 = vunpack.c.l.b16 %v84
    %v465 = vunpack.c.h.b16 %v84
    %v466 = vunpack.c.l.b16 %v85
    %v467 = vunpack.c.h.b16 %v85
    %v468 = vunpack.c.l.b16 %v86
    %v469 = vunpack.c.h.b16 %v86
    %v470 = vunpack.c.l.b16 %v87
    %v471 = vunpack.c.h.b16 %v87
    %v472 = vunpack.c.l.b16 %v88
    %v473 = vunpack.c.h.b16 %v88
    %v474 = vunpack.c.l.b16 %v89
    %v475 = vunpack.c.h.b16 %v89
    %v476 = vunpack.c.l.b16 %v90
    %v477 = vunpack.c.h.b16 %v90
    %v478 = vunpack.c.l.b16 %v91
    %v479 = vunpack.c.h.b16 %v91
    %v480 = vunpack.c.l.b16 %v92
    %v481 = vunpack.c.h.b16 %v92
    %v482 = vunpack.c.l.b16 %v93
    %v483 = vunpack.c.h.b16 %v93
    %v484 = vunpack.c.l.b16 %v94
    %v485 = vunpack.c.h.b16 %v94
    %v486 = vunpack.c.l.b16 %v95
    %v487 = vunpack.c.h.b16 %v95
    %v488 = vunpack.c.l.b16 %v96
    %v489 = vunpack.c.h.b16 %v96
    %v490 = vunpack.c.l.b16 %v97
    %v491 = vunpack.c.h.b16 %v97
    %v492 = vunpack.c.l.b16 %v98
    %v493 = vunpack.c.h.b16 %v98
    %v494 = vunpack.c.l.b16 %v99
    %v495 = vunpack.c.h.b16 %v99
    %v496 = vunpack.c.l.b16 %v100
    %v497 = vunpack.c.h.b16 %v100
    %v498 = vunpack.c.l.b16 %v101
    %v499 = vunpack.c.h.b16 %v101
    %v500 = vunpack.c.l.b16 %v102
    %v501 = vunpack.c.h.b16 %v102
    %v502 = vunpack.c.l.b16 %v103
    %v503 = vunpack.c.h.b16 %v103
    %v504 = vunpack.c.l.b16 %v104
    %v505 = vunpack.c.h.b16 %v104
    %v506 = vunpack.c.l.b16 %v105
    %v507 = vunpack.c.h.b16 %v105
    %v508 = vunpack.c.l.b16 %v106
    %v509 = vunpack.c.h.b16 %v106
    %v510 = vunpack.c.l.b16 %v107
    %v511 = vunpack.c.h.b16 %v107
    %v512 = vunpack.c.l.b16 %v108
    %v513 = vunpack.c.h.b16 %v108
    %v514 = vunpack.c.l.b16 %v109
    %v515 = vunpack.c.h.b16 %v109
    %v516 = vunpack.c.l.b16 %v110
    %v517 = vunpack.c.h.b16 %v110
    %v518 = vunpack.c.l.b16 %v111
    %v519 = vunpack.c.h.b16 %v111
    %v520 = vunpack.c.l.b16 %v112
    %v521 = vunpack.c.h.b16 %v112
    %v522 = vunpack.c.l.b16 %v113
    %v523 = vunpack.c.h.b16 %v113
    %v524 = vunpack.c.l.b16 %v114
    %v525 = vunpack.c.h.b16 %v114
    %v526 = vunpack.c.l.b16 %v115
    %v527 = vunpack.c.h.b16 %v115
    %v528 = vunpack.c.l.b16 %v116
    %v529 = vunpack.c.h.b16 %v116
    %v530 = vunpack.c.l.b16 %v117
    %v531 = vunpack.c.h.b16 %v117
    %v532 = vunpack.c.l.b16 %v118
    %v533 = vunpack.c.h.b16 %v118
    %v534 = vunpack.c.l.b16 %v119
    %v535 = vunpack.c.h.b16 %v119
    %v536 = vunpack.c.l.b16 %v120
    %v537 = vunpack.c.h.b16 %v120
    %v538 = vunpack.c.l.b16 %v121
    %v539 = vunpack.c.h.b16 %v121
    %v540 = vunpack.c.l.b16 %v122
    %v541 = vunpack.c.h.b16 %v122
    %v542 = vunpack.c.l.b16 %v123
    %v543 = vunpack.c.h.b16 %v123
    %v544 = vunpack.c.l.b16 %v124
    %v545 = vunpack.c.h.b16 %v124
    %v546 = vunpack.c.l.b16 %v125
    %v547 = vunpack.c.h.b16 %v125
    %v548 = vunpack.c.l.b16 %v126
    %v549 = vunpack.c.h.b16 %v126
    %v550 = vunpack.c.l.b16 %v127
    %v551 = vunpack.c.h.b16 %v127
    %v552 = vunpack.c.l.b16 %v128
    %v553 = vunpack.c.h.b16 %v128
    %v554 = vunpack.c.l.b16 %v129
    %v555 = vunpack.c.h.b16 %v129
    %v556 = vunpack.c.l.b16 %v130
    %v557 = vunpack.c.h.b16 %v130
    %v558 = vunpack.c.l.b16 %v131
    %v559 = vunpack.c.h.b16 %v131
    %v560 = vunpack.c.l.b16 %v132
    %v561 = vunpack.c.h.b16 %v132
    %v562 = vunpack.c.l.b16 %v133
    %v563 = vunpack.c.h.b16 %v133
    %v564 = vunpack.c.l.b16 %v134
    %v565 = vunpack.c.h.b16 %v134
    %v566 = vunpack.c.l.b16 %v135
    %v567 = vunpack.c.h.b16 %v135
    %v568 = vunpack.c.l.b16 %v136
    %v569 = vunpack.c.h.b16 %v136
    %v570 = vunpack.c.l.b16 %v137
    %v571 = vunpack.c.h.b16 %v137
    %v572 = vunpack.c.l.b16 %v138
    %v573 = vunpack.c.h.b16 %v138
    %v574 = vunpack.c.l.b16 %v139
    %v575 = vunpack.c.h.b16 %v139
    %v576 = vunpack.c.l.b16 %v140
    %v577 = vunpack.c.h.b16 %v140
    %v578 = vunpack.c.l.b16 %v141
    %v579 = vunpack.c.h.b16 %v141
    %v580 = vunpack.c.l.b16 %v142
    %v581 = vunpack.c.h.b16 %v142
    %v582 = vunpack.c.l.b16 %v143
    %v583 = vunpack.c.h.b16 %v143
    %v584 = vunpack.c.l.b16 %v144
    %v585 = vunpack.c.h.b16 %v144
    %v586 = vunpack.c.l.b16 %v145
    %v587 = vunpack.c.h.b16 %v145
    %v588 = vunpack.c.l.b16 %v146
    %v589 = vunpack.c.h.b16 %v146
    %v590 = vunpack.c.l.b16 %v147
    %v591 = vunpack.c.h.b16 %v147
    %v592 = vunpack.c.l.b16 %v148
    %v593 = vunpack.c.h.b16 %v148
    %v594 = vunpack.c.l.b16 %v149
    %v595 = vunpack.c.h.b16 %v149
    %v596 = vunpack.c.l.b16 %v150
    %v597 = vunpack.c.h.b16 %v150
    %v598 = vunpack.c.l.b16 %v151
    %v599 = vunpack.c.h.b16 %v151
    %v600 = vunpack.c.l.b16 %v152
    %v601 = vunpack.c.h.b16 %v152
    %v602 = vunpack.c.l.b16 %v153
    %v603 = vunpack.c.h.b16 %v153
    %v604 = vunpack.c.l.b16 %v154
    %v605 = vunpack.c.h.b16 %v154
    %v606 = vunpack.c.l.b16 %v155
    %v607 = vunpack.c.h.b16 %v155
    %v608 = vunpack.c.l.b16 %v156
    %v609 = vunpack.c.h.b16 %v156
    %v610 = vunpack.c.l.b16 %v157
    %v611 = vunpack.c.h.b16 %v157
    %v612 = vunpack.c.l.b16 %v158
    %v613 = vunpack.c.h.b16 %v158
    %v614 = vunpack.c.l.b16 %v159
    %v615 = vunpack.c.h.b16 %v159
    %v616 = vunpack.c.l.b16 %v160
    %v617 = vunpack.c.h.b16 %v160
    %v618 = vunpack.c.l.b16 %v161
    %v619 = vunpack.c.h.b16 %v161
    %v620 = vunpack.c.l.b16 %v162
    %v621 = vunpack.c.h.b16 %v162
    %v622 = vunpack.c.l.b16 %v163
    %v623 = vunpack.c.h.b16 %v163
    %v624 = vunpack.c.l.b16 %v164
    %v625 = vunpack.c.h.b16 %v164
    %v626 = vunpack.c.l.b16 %v165
    %v627 = vunpack.c.h.b16 %v165
    %v628 = vunpack.c.l.b16 %v166
    %v629 = vunpack.c.h.b16 %v166
    %v630 = vunpack.c.l.b16 %v167
    %v631 = vunpack.c.h.b16 %v167
    %v632 = vunpack.c.l.b16 %v168
    %v633 = vunpack.c.h.b16 %v168
    %v634 = vunpack.c.l.b16 %v169
    %v635 = vunpack.c.h.b16 %v169
    %v636 = vunpack.c.l.b16 %v170
    %v637 = vunpack.c.h.b16 %v170
    %v638 = vunpack.c.l.b16 %v171
    %v639 = vunpack.c.h.b16 %v171
    %v640 = vunpack.c.l.b16 %v172
    %v641 = vunpack.c.h.b16 %v172
    %v642 = vunpack.c.l.b16 %v173
    %v643 = vunpack.c.h.b16 %v173
    %v644 = vunpack.c.l.b16 %v174
    %v645 = vunpack.c.h.b16 %v174
    %v646 = vunpack.c.l.b16 %v175
    %v647 = vunpack.c.h.b16 %v175
    %v648 = vunpack.c.l.b16 %v176
    %v649 = vunpack.c.h.b16 %v176
    %v650 = vunpack.c.l.b16 %v177
    %v651 = vunpack.c.h.b16 %v177
    %v652 = vunpack.c.l.b16 %v178
    %v653 = vunpack.c.h.b16 %v178
    %v654 = vunpack.c.l.b16 %v179
    %v655 = vunpack.c.h.b16 %v179
    %v656 = vunpack.c.l.b16 %v180
    %v657 = vunpack.c.h.b16 %v180
    %v658 = vunpack.c.l.b16 %v181
    %v659 = vunpack.c.h.b16 %v181
    %v660 = vunpack.c.l.b16 %v182
    %v661 = vunpack.c.h.b16 %v182
    %v662 = vunpack.c.l.b16 %v183
    %v663 = vunpack.c.h.b16 %v183
    %v664 = vunpack.c.l.b16 %v184
    %v665 = vunpack.c.h.b16 %v184
    %v666 = vunpack.c.l.b16 %v185
    %v667 = vunpack.c.h.b16 %v185
    %v668 = vunpack.c.l.b16 %v186
    %v669 = vunpack.c.h.b16 %v186
    %v670 = vunpack.c.l.b16 %v187
    %v671 = vunpack.c.h.b16 %v187
    %v672 = vunpack.c.l.b16 %v188
    %v673 = vunpack.c.h.b16 %v188
    %v674 = vunpack.c.l.b16 %v189
    %v675 = vunpack.c.h.b16 %v189
    %v676 = vunpack.c.l.b16 %v190
    %v677 = vunpack.c.h.b16 %v190
    %v678 = vunpack.c.l.b16 %v191
    %v679 = vunpack.c.h.b16 %v191
    %v680 = vunpack.c.l.b16 %v192
    %v681 = vunpack.c.h.b16 %v192
    %v682 = vunpack.c.l.b16 %v193
    %v683 = vunpack.c.h.b16 %v193
    %v684 = vunpack.c.l.b16 %v194
    %v685 = vunpack.c.h.b16 %v194
    %v686 = vunpack.c.l.b16 %v195
    %v687 = vunpack.c.h.b16 %v195
    %v688 = vunpack.c.l.b16 %v196
    %v689 = vunpack.c.h.b16 %v196
    %v690 = vunpack.c.l.b16 %v197
    %v691 = vunpack.c.h.b16 %v197
    %v692 = vunpack.c.l.b16 %v198
    %v693 = vunpack.c.h.b16 %v198
    %v694 = vunpack.c.l.b16 %v199
    %v695 = vunpack.c.h.b16 %v199
    %v696 = vunpack.c.l.b16 %v200
    %v697 = vunpack.c.h.b16 %v200
    %v698 = vunpack.c.l.b16 %v201
    %v699 = vunpack.c.h.b16 %v201
    %v700 = vunpack.c.l.b16 %v202
    %v701 = vunpack.c.h.b16 %v202
    %v702 = vunpack.c.l.b16 %v203
    %v703 = vunpack.c.h.b16 %v203
    %v704 = vunpack.c.l.b16 %v204
    %v705 = vunpack.c.h.b16 %v204
    %v706 = vunpack.c.l.b16 %v205
    %v707 = vunpack.c.h.b16 %v205
    %v708 = vunpack.c.l.b16 %v206
    %v709 = vunpack.c.h.b16 %v206
    %v710 = vunpack.c.l.b16 %v207
    %v711 = vunpack.c.h.b16 %v207
    %v712 = vunpack.c.l.b16 %v208
    %v713 = vunpack.c.h.b16 %v208
    %v714 = vunpack.c.l.b16 %v209
    %v715 = vunpack.c.h.b16 %v209
    %v716 = vpack.c.b16 %v400, %v396
    %v717 = vpack.c.b16 %v401, %v397
    %v718 = vpack.c.b16 %v402, %v398
    %v719 = vpack.c.b16 %v403, %v399
    %v720 = vpack.c.b16 %v408, %v404
    %v721 = vpack.c.b16 %v409, %v405
    %v722 = vpack.c.b16 %v410, %v406
    %v723 = vpack.c.b16 %v411, %v407
    %v724 = vpack.c.b16 %v416, %v412
    %v725 = vpack.c.b16 %v417, %v413
    %v726 = vpack.c.b16 %v418, %v414
    %v727 = vpack.c.b16 %v419, %v415
    %v728 = vpack.c.b16 %v424, %v420
    %v729 = vpack.c.b16 %v425, %v421
    %v730 = vpack.c.b16 %v426, %v422
    %v731 = vpack.c.b16 %v427, %v423
    %v732 = vpack.c.b16 %v432, %v428
    %v733 = vpack.c.b16 %v433, %v429
    %v734 = vpack.c.b16 %v434, %v430
    %v735 = vpack.c.b16 %v435, %v431
    %v736 = vpack.c.b16 %v440, %v436
    %v737 = vpack.c.b16 %v441, %v437
    %v738 = vpack.c.b16 %v442, %v438
    %v739 = vpack.c.b16 %v443, %v439
    %v740 = vpack.c.b16 %v448, %v444
    %v741 = vpack.c.b16 %v449, %v445
    %v742 = vpack.c.b16 %v450, %v446
    %v743 = vpack.c.b16 %v451, %v447
    %v744 = vpack.c.b16 %v456, %v452
    %v745 = vpack.c.b16 %v457, %v453
    %v746 = vpack.c.b16 %v458, %v454
    %v747 = vpack.c.b16 %v459, %v455
    %v748 = vpack.c.b16 %v464, %v460
    %v749 = vpack.c.b16 %v465, %v461
    %v750 = vpack.c.b16 %v466, %v462
    %v751 = vpack.c.b16 %v467, %v463
    %v752 = vpack.c.b16 %v472, %v468
    %v753 = vpack.c.b16 %v473, %v469
    %v754 = vpack.c.b16 %v474, %v470
    %v755 = vpack.c.b16 %v475, %v471
    %v756 = vpack.c.b16 %v480, %v476
    %v757 = vpack.c.b16 %v481, %v477
    %v758 = vpack.c.b16 %v482, %v478
    %v759 = vpack.c.b16 %v483, %v479
    %v760 = vpack.c.b16 %v488, %v484
    %v761 = vpack.c.b16 %v489, %v485
    %v762 = vpack.c.b16 %v490, %v486
    %v763 = vpack.c.b16 %v491, %v487
    %v764 = vpack.c.b16 %v496, %v492
    %v765 = vpack.c.b16 %v497, %v493
    %v766 = vpack.c.b16 %v498, %v494
    %v767 = vpack.c.b16 %v499, %v495
    %v768 = vpack.c.b16 %v504, %v500
    %v769 = vpack.c.b16 %v505, %v501
    %v770 = vpack.c.b16 %v506, %v502
    %v771 = vpack.c.b16 %v507, %v503
    %v772 = vpack.c.b16 %v512, %v508
    %v773 = vpack.c.b16 %v513, %v509
    %v774 = vpack.c.b16 %v514, %v510
    %v775 = vpack.c.b16 %v515, %v511
    %v776 = vpack.c.b16 %v520, %v516
    %v777 = vpack.c.b16 %v521, %v517
    %v778 = vpack.c.b16 %v522, %v518
    %v779 = vpack.c.b16 %v523, %v519
    %v780 = vpack.c.b16 %v528, %v524
    %v781 = vpack.c.b16 %v529, %v525
    %v782 = vpack.c.b16 %v530, %v526
    %v783 = vpack.c.b16 %v531, %v527
    %v784 = vpack.c.b16 %v536, %v532
    %v785 = vpack.c.b16 %v537, %v533
    %v786 = vpack.c.b16 %v538, %v534
    %v787 = vpack.c.b16 %v539, %v535
    %v788 = vpack.c.b16 %v544, %v540
    %v789 = vpack.c.b16 %v545, %v541
    %v790 = vpack.c.b16 %v546, %v542
    %v791 = vpack.c.b16 %v547, %v543
    %v792 = vpack.c.b16 %v552, %v548
    %v793 = vpack.c.b16 %v553, %v549
    %v794 = vpack.c.b16 %v554, %v550
    %v795 = vpack.c.b16 %v555, %v551
    %v796 = vpack.c.b16 %v560, %v556
    %v797 = vpack.c.b16 %v561, %v557
    %v798 = vpack.c.b16 %v562, %v558
    %v799 = vpack.c.b16 %v563, %v559
    %v800 = vpack.c.b16 %v568, %v564
    %v801 = vpack.c.b16 %v569, %v565
    %v802 = vpack.c.b16 %v570, %v566
    %v803 = vpack.c.b16 %v571, %v567
    %v804 = vpack.c.b16 %v576, %v572
    %v805 = vpack.c.b16 %v577, %v573
    %v806 = vpack.c.b16 %v578, %v574
    %v807 = vpack.c.b16 %v579, %v575
    %v808 = vpack.c.b16 %v584, %v580
    %v809 = vpack.c.b16 %v585, %v581
    %v810 = vpack.c.b16 %v586, %v582
    %v811 = vpack.c.b16 %v587, %v583
    %v812 = vpack.c.b16 %v592, %v588
    %v813 = vpack.c.b16 %v593, %v589
    %v814 = vpack.c.b16 %v594, %v590
    %v815 = vpack.c.b16 %v595, %v591
    %v816 = vpack.c.b16 %v600, %v596
    %v817 = vpack.c.b16 %v601, %v597
    %v818 = vpack.c.b16 %v602, %v598
    %v819 = vpack.c.b16 %v603, %v599
    %v820 = vpack.c.b16 %v608, %v604
    %v821 = vpack.c.b16 %v609, %v605
    %v822 = vpack.c.b16 %v610, %v606
    %v823 = vpack.c.b16 %v611, %v607
    %v824 = vpack.c.b16 %v616, %v612
    %v825 = vpack.c.b16 %v617, %v613
    %v826 = vpack.c.b16 %v618, %v614
    %v827 = vpack.c.b16 %v619, %v615
    %v828 = vpack.c.b16 %v624, %v620
    %v829 = vpack.c.b16 %v625, %v621
    %v830 = vpack.c.b16 %v626, %v622
    %v831 = vpack.c.b16 %v627, %v623
    %v832 = vpack.c.b16 %v632, %v628
    %v833 = vpack.c.b16 %v633, %v629
    %v834 = vpack.c.b16 %v634, %v630
    %v835 = vpack.c.b16 %v635, %v631
    %v836 = vpack.c.b16 %v640, %v636
    %v837 = vpack.c.b16 %v641, %v637
    %v838 = vpack.c.b16 %v642, %v638
    %v839 = vpack.c.b16 %v643, %v639
    %v840 = vpack.c.b16 %v648, %v644
    %v841 = vpack.c.b16 %v649, %v645
    %v842 = vpack.c.b16 %v650, %v646
    %v843 = vpack.c.b16 %v651, %v647
    %v844 = vpack.c.b16 %v656, %v652
    %v845 = vpack.c.b16 %v657, %v653
    %v846 = vpack.c.b16 %v658, %v654
    %v847 = vpack.c.b16 %v659, %v655
    %v848 = vpack.c.b16 %v664, %v660
    %v849 = vpack.c.b16 %v665, %v661
    %v850 = vpack.c.b16 %v666, %v662
    %v851 = vpack.c.b16 %v667, %v663
    %v852 = vpack.c.b16 %v672, %v668
    %v853 = vpack.c.b16 %v673, %v669
    %v854 = vpack.c.b16 %v674, %v670
    %v855 = vpack.c.b16 %v675, %v671
    %v856 = vpack.c.b16 %v680, %v676
    %v857 = vpack.c.b16 %v681, %v677
    %v858 = vpack.c.b16 %v682, %v678
    %v859 = vpack.c.b16 %v683, %v679
    %v860 = vpack.c.b16 %v688, %v684
    %v861 = vpack.c.b16 %v689, %v685
    %v862 = vpack.c.b16 %v690, %v686
    %v863 = vpack.c.b16 %v691, %v687
    %v864 = vpack.c.b16 %v696, %v692
    %v865 = vpack.c.b16 %v697, %v693
    %v866 = vpack.c.b16 %v698, %v694
    %v867 = vpack.c.b16 %v699, %v695
    %v868 = vpack.c.b16 %v704, %v700
    %v869 = vpack.c.b16 %v705, %v701
    %v870 = vpack.c.b16 %v706, %v702
    %v871 = vpack.c.b16 %v707, %v703
    %v872 = vpack.c.b16 %v712, %v708
    %v873 = vpack.c.b16 %v713, %v709
    %v874 = vpack.c.b16 %v714, %v710
    %v875 = vpack.c.b16 %v715, %v711
    %1036 = vmatpush.bf16.msra.mxu0 %v744
    %1037 = vmatpush.bf16.msra.mxu0 %v740
    %1038 = vmatpush.bf16.msra.mxu0 %v736
    %1039 = vmatpush.bf16.msra.mxu0 %v732
    %1040 = vmatpush.bf16.msra.mxu0 %v728
    %1041 = vmatpush.bf16.msra.mxu0 %v724
    %1042 = vmatpush.bf16.msra.mxu0 %v720
    %1043 = vmatpush.bf16.msra.mxu0 %v716
    %1044 = vmatmul.bf16.gmra.mxu0 %v226
    %v1045 = vpop.f32.mrf.mxu0
    %v1046 = vadd.f32 0.0, %v1045
    %v1047 = vpop.f32.mrf.mxu0
    %v1048 = vadd.f32 0.0, %v1047
    %1049 = vdwg.mxu0
    %1050 = vmatpush.bf16.msra.mxu0 %v776
    %1051 = vmatpush.bf16.msra.mxu0 %v772
    %1052 = vmatpush.bf16.msra.mxu0 %v768
    %1053 = vmatpush.bf16.msra.mxu0 %v764
    %1054 = vmatpush.bf16.msra.mxu0 %v760
    %1055 = vmatpush.bf16.msra.mxu0 %v756
    %1056 = vmatpush.bf16.msra.mxu0 %v752
    %1057 = vmatpush.bf16.msra.mxu0 %v748
    %1058 = vmatmul.bf16.gmra.mxu0 %v227
    %v1059 = vpop.f32.mrf.mxu0
    %v1060 = vadd.f32 %v1046, %v1059
    %v1061 = vpop.f32.mrf.mxu0
    %v1062 = vadd.f32 %v1048, %v1061
    %1063 = vdwg.mxu0
    %1064 = vmatpush.bf16.msra.mxu0 %v808
    %1065 = vmatpush.bf16.msra.mxu0 %v804
    %1066 = vmatpush.bf16.msra.mxu0 %v800
    %1067 = vmatpush.bf16.msra.mxu0 %v796
    %1068 = vmatpush.bf16.msra.mxu0 %v792
    %1069 = vmatpush.bf16.msra.mxu0 %v788
    %1070 = vmatpush.bf16.msra.mxu0 %v784
    %1071 = vmatpush.bf16.msra.mxu0 %v780
    %1072 = vmatmul.bf16.gmra.mxu0 %v228
    %v1073 = vpop.f32.mrf.mxu0
    %v1074 = vadd.f32 %v1060, %v1073
    %v1075 = vpop.f32.mrf.mxu0
    %v1076 = vadd.f32 %v1062, %v1075
    %1077 = vdwg.mxu0
    %1078 = vmatpush.bf16.msra.mxu0 %v840
    %1079 = vmatpush.bf16.msra.mxu0 %v836
    %1080 = vmatpush.bf16.msra.mxu0 %v832
    %1081 = vmatpush.bf16.msra.mxu0 %v828
    %1082 = vmatpush.bf16.msra.mxu0 %v824
    %1083 = vmatpush.bf16.msra.mxu0 %v820
    %1084 = vmatpush.bf16.msra.mxu0 %v816
    %1085 = vmatpush.bf16.msra.mxu0 %v812
    %1086 = vmatmul.bf16.gmra.mxu0 %v229
    %v1087 = vpop.f32.mrf.mxu0
    %v1088 = vadd.f32 %v1074, %v1087
    %v1089 = vpop.f32.mrf.mxu0
    %v1090 = vadd.f32 %v1076, %v1089
    %1091 = vdwg.mxu0
    %1092 = vmatpush.bf16.msra.mxu0 %v872
    %1093 = vmatpush.bf16.msra.mxu0 %v868
    %1094 = vmatpush.bf16.msra.mxu0 %v864
    %1095 = vmatpush.bf16.msra.mxu0 %v860
    %1096 = vmatpush.bf16.msra.mxu0 %v856
    %1097 = vmatpush.bf16.msra.mxu0 %v852
    %1098 = vmatpush.bf16.msra.mxu0 %v848
    %1099 = vmatpush.bf16.msra.mxu0 %v844
    %1100 = vmatmul.bf16.gmra.mxu0 %v230
    %v1101 = vpop.f32.mrf.mxu0
    %v1102 = vadd.f32 %v1088, %v1101
    %v1103 = vpop.f32.mrf.mxu0
    %v1104 = vadd.f32 %v1090, %v1103
    %1105 = vdwg.mxu0
    %1106 = vmatpush.bf16.msra.mxu0 %v745
    %1107 = vmatpush.bf16.msra.mxu0 %v741
    %1108 = vmatpush.bf16.msra.mxu0 %v737
    %1109 = vmatpush.bf16.msra.mxu0 %v733
    %1110 = vmatpush.bf16.msra.mxu0 %v729
    %1111 = vmatpush.bf16.msra.mxu0 %v725
    %1112 = vmatpush.bf16.msra.mxu0 %v721
    %1113 = vmatpush.bf16.msra.mxu0 %v717
    %1114 = vmatmul.bf16.gmra.mxu0 %v226
    %v1115 = vpop.f32.mrf.mxu0
    %v1116 = vadd.f32 0.0, %v1115
    %v1117 = vpop.f32.mrf.mxu0
    %v1118 = vadd.f32 0.0, %v1117
    %1119 = vdwg.mxu0
    %1120 = vmatpush.bf16.msra.mxu0 %v777
    %1121 = vmatpush.bf16.msra.mxu0 %v773
    %1122 = vmatpush.bf16.msra.mxu0 %v769
    %1123 = vmatpush.bf16.msra.mxu0 %v765
    %1124 = vmatpush.bf16.msra.mxu0 %v761
    %1125 = vmatpush.bf16.msra.mxu0 %v757
    %1126 = vmatpush.bf16.msra.mxu0 %v753
    %1127 = vmatpush.bf16.msra.mxu0 %v749
    %1128 = vmatmul.bf16.gmra.mxu0 %v227
    %v1129 = vpop.f32.mrf.mxu0
    %v1130 = vadd.f32 %v1116, %v1129
    %v1131 = vpop.f32.mrf.mxu0
    %v1132 = vadd.f32 %v1118, %v1131
    %1133 = vdwg.mxu0
    %1134 = vmatpush.bf16.msra.mxu0 %v809
    %1135 = vmatpush.bf16.msra.mxu0 %v805
    %1136 = vmatpush.bf16.msra.mxu0 %v801
    %1137 = vmatpush.bf16.msra.mxu0 %v797
    %1138 = vmatpush.bf16.msra.mxu0 %v793
    %1139 = vmatpush.bf16.msra.mxu0 %v789
    %1140 = vmatpush.bf16.msra.mxu0 %v785
    %1141 = vmatpush.bf16.msra.mxu0 %v781
    %1142 = vmatmul.bf16.gmra.mxu0 %v228
    %v1143 = vpop.f32.mrf.mxu0
    %v1144 = vadd.f32 %v1130, %v1143
    %v1145 = vpop.f32.mrf.mxu0
    %v1146 = vadd.f32 %v1132, %v1145
    %1147 = vdwg.mxu0
    %1148 = vmatpush.bf16.msra.mxu0 %v841
    %1149 = vmatpush.bf16.msra.mxu0 %v837
    %1150 = vmatpush.bf16.msra.mxu0 %v833
    %1151 = vmatpush.bf16.msra.mxu0 %v829
    %1152 = vmatpush.bf16.msra.mxu0 %v825
    %1153 = vmatpush.bf16.msra.mxu0 %v821
    %1154 = vmatpush.bf16.msra.mxu0 %v817
    %1155 = vmatpush.bf16.msra.mxu0 %v813
    %1156 = vmatmul.bf16.gmra.mxu0 %v229
    %v1157 = vpop.f32.mrf.mxu0
    %v1158 = vadd.f32 %v1144, %v1157
    %v1159 = vpop.f32.mrf.mxu0
    %v1160 = vadd.f32 %v1146, %v1159
    %1161 = vdwg.mxu0
    %1162 = vmatpush.bf16.msra.mxu0 %v873
    %1163 = vmatpush.bf16.msra.mxu0 %v869
    %1164 = vmatpush.bf16.msra.mxu0 %v865
    %1165 = vmatpush.bf16.msra.mxu0 %v861
    %1166 = vmatpush.bf16.msra.mxu0 %v857
    %1167 = vmatpush.bf16.msra.mxu0 %v853
    %1168 = vmatpush.bf16.msra.mxu0 %v849
    %1169 = vmatpush.bf16.msra.mxu0 %v845
    %1170 = vmatmul.bf16.gmra.mxu0 %v230
    %v1171 = vpop.f32.mrf.mxu0
    %v1172 = vadd.f32 %v1158, %v1171
    %v1173 = vpop.f32.mrf.mxu0
    %v1174 = vadd.f32 %v1160, %v1173
    %1175 = vdwg.mxu0
    %1176 = vmatpush.bf16.msra.mxu0 %v746
    %1177 = vmatpush.bf16.msra.mxu0 %v742
    %1178 = vmatpush.bf16.msra.mxu0 %v738
    %1179 = vmatpush.bf16.msra.mxu0 %v734
    %1180 = vmatpush.bf16.msra.mxu0 %v730
    %1181 = vmatpush.bf16.msra.mxu0 %v726
    %1182 = vmatpush.bf16.msra.mxu0 %v722
    %1183 = vmatpush.bf16.msra.mxu0 %v718
    %1184 = vmatmul.bf16.gmra.mxu0 %v226
    %v1185 = vpop.f32.mrf.mxu0
    %v1186 = vadd.f32 0.0, %v1185
    %v1187 = vpop.f32.mrf.mxu0
    %v1188 = vadd.f32 0.0, %v1187
    %1189 = vdwg.mxu0
    %1190 = vmatpush.bf16.msra.mxu0 %v778
    %1191 = vmatpush.bf16.msra.mxu0 %v774
    %1192 = vmatpush.bf16.msra.mxu0 %v770
    %1193 = vmatpush.bf16.msra.mxu0 %v766
    %1194 = vmatpush.bf16.msra.mxu0 %v762
    %1195 = vmatpush.bf16.msra.mxu0 %v758
    %1196 = vmatpush.bf16.msra.mxu0 %v754
    %1197 = vmatpush.bf16.msra.mxu0 %v750
    %1198 = vmatmul.bf16.gmra.mxu0 %v227
    %v1199 = vpop.f32.mrf.mxu0
    %v1200 = vadd.f32 %v1186, %v1199
    %v1201 = vpop.f32.mrf.mxu0
    %v1202 = vadd.f32 %v1188, %v1201
    %1203 = vdwg.mxu0
    %1204 = vmatpush.bf16.msra.mxu0 %v810
    %1205 = vmatpush.bf16.msra.mxu0 %v806
    %1206 = vmatpush.bf16.msra.mxu0 %v802
    %1207 = vmatpush.bf16.msra.mxu0 %v798
    %1208 = vmatpush.bf16.msra.mxu0 %v794
    %1209 = vmatpush.bf16.msra.mxu0 %v790
    %1210 = vmatpush.bf16.msra.mxu0 %v786
    %1211 = vmatpush.bf16.msra.mxu0 %v782
    %1212 = vmatmul.bf16.gmra.mxu0 %v228
    %v1213 = vpop.f32.mrf.mxu0
    %v1214 = vadd.f32 %v1200, %v1213
    %v1215 = vpop.f32.mrf.mxu0
    %v1216 = vadd.f32 %v1202, %v1215
    %1217 = vdwg.mxu0
    %1218 = vmatpush.bf16.msra.mxu0 %v842
    %1219 = vmatpush.bf16.msra.mxu0 %v838
    %1220 = vmatpush.bf16.msra.mxu0 %v834
    %1221 = vmatpush.bf16.msra.mxu0 %v830
    %1222 = vmatpush.bf16.msra.mxu0 %v826
    %1223 = vmatpush.bf16.msra.mxu0 %v822
    %1224 = vmatpush.bf16.msra.mxu0 %v818
    %1225 = vmatpush.bf16.msra.mxu0 %v814
    %1226 = vmatmul.bf16.gmra.mxu0 %v229
    %v1227 = vpop.f32.mrf.mxu0
    %v1228 = vadd.f32 %v1214, %v1227
    %v1229 = vpop.f32.mrf.mxu0
    %v1230 = vadd.f32 %v1216, %v1229
    %1231 = vdwg.mxu0
    %1232 = vmatpush.bf16.msra.mxu0 %v874
    %1233 = vmatpush.bf16.msra.mxu0 %v870
    %1234 = vmatpush.bf16.msra.mxu0 %v866
    %1235 = vmatpush.bf16.msra.mxu0 %v862
    %1236 = vmatpush.bf16.msra.mxu0 %v858
    %1237 = vmatpush.bf16.msra.mxu0 %v854
    %1238 = vmatpush.bf16.msra.mxu0 %v850
    %1239 = vmatpush.bf16.msra.mxu0 %v846
    %1240 = vmatmul.bf16.gmra.mxu0 %v230
    %v1241 = vpop.f32.mrf.mxu0
    %v1242 = vadd.f32 %v1228, %v1241
    %v1243 = vpop.f32.mrf.mxu0
    %v1244 = vadd.f32 %v1230, %v1243
    %1245 = vdwg.mxu0
    %1246 = vmatpush.bf16.msra.mxu0 %v747
    %1247 = vmatpush.bf16.msra.mxu0 %v743
    %1248 = vmatpush.bf16.msra.mxu0 %v739
    %1249 = vmatpush.bf16.msra.mxu0 %v735
    %1250 = vmatpush.bf16.msra.mxu0 %v731
    %1251 = vmatpush.bf16.msra.mxu0 %v727
    %1252 = vmatpush.bf16.msra.mxu0 %v723
    %1253 = vmatpush.bf16.msra.mxu0 %v719
    %1254 = vmatmul.bf16.gmra.mxu0 %v226
    %v1255 = vpop.f32.mrf.mxu0
    %v1256 = vadd.f32 0.0, %v1255
    %v1257 = vpop.f32.mrf.mxu0
    %v1258 = vadd.f32 0.0, %v1257
    %1259 = vdwg.mxu0
    %1260 = vmatpush.bf16.msra.mxu0 %v779
    %1261 = vmatpush.bf16.msra.mxu0 %v775
    %1262 = vmatpush.bf16.msra.mxu0 %v771
    %1263 = vmatpush.bf16.msra.mxu0 %v767
    %1264 = vmatpush.bf16.msra.mxu0 %v763
    %1265 = vmatpush.bf16.msra.mxu0 %v759
    %1266 = vmatpush.bf16.msra.mxu0 %v755
    %1267 = vmatpush.bf16.msra.mxu0 %v751
    %1268 = vmatmul.bf16.gmra.mxu0 %v227
    %v1269 = vpop.f32.mrf.mxu0
    %v1270 = vadd.f32 %v1256, %v1269
    %v1271 = vpop.f32.mrf.mxu0
    %v1272 = vadd.f32 %v1258, %v1271
    %1273 = vdwg.mxu0
    %1274 = vmatpush.bf16.msra.mxu0 %v811
    %1275 = vmatpush.bf16.msra.mxu0 %v807
    %1276 = vmatpush.bf16.msra.mxu0 %v803
    %1277 = vmatpush.bf16.msra.mxu0 %v799
    %1278 = vmatpush.bf16.msra.mxu0 %v795
    %1279 = vmatpush.bf16.msra.mxu0 %v791
    %1280 = vmatpush.bf16.msra.mxu0 %v787
    %1281 = vmatpush.bf16.msra.mxu0 %v783
    %1282 = vmatmul.bf16.gmra.mxu0 %v228
    %v1283 = vpop.f32.mrf.mxu0
    %v1284 = vadd.f32 %v1270, %v1283
    %v1285 = vpop.f32.mrf.mxu0
    %v1286 = vadd.f32 %v1272, %v1285
    %1287 = vdwg.mxu0
    %1288 = vmatpush.bf16.msra.mxu0 %v843
    %1289 = vmatpush.bf16.msra.mxu0 %v839
    %1290 = vmatpush.bf16.msra.mxu0 %v835
    %1291 = vmatpush.bf16.msra.mxu0 %v831
    %1292 = vmatpush.bf16.msra.mxu0 %v827
    %1293 = vmatpush.bf16.msra.mxu0 %v823
    %1294 = vmatpush.bf16.msra.mxu0 %v819
    %1295 = vmatpush.bf16.msra.mxu0 %v815
    %1296 = vmatmul.bf16.gmra.mxu0 %v229
    %v1297 = vpop.f32.mrf.mxu0
    %v1298 = vadd.f32 %v1284, %v1297
    %v1299 = vpop.f32.mrf.mxu0
    %v1300 = vadd.f32 %v1286, %v1299
    %1301 = vdwg.mxu0
    %1302 = vmatpush.bf16.msra.mxu0 %v875
    %1303 = vmatpush.bf16.msra.mxu0 %v871
    %1304 = vmatpush.bf16.msra.mxu0 %v867
    %1305 = vmatpush.bf16.msra.mxu0 %v863
    %1306 = vmatpush.bf16.msra.mxu0 %v859
    %1307 = vmatpush.bf16.msra.mxu0 %v855
    %1308 = vmatpush.bf16.msra.mxu0 %v851
    %1309 = vmatpush.bf16.msra.mxu0 %v847
    %1310 = vmatmul.bf16.gmra.mxu0 %v230
    %v1311 = vpop.f32.mrf.mxu0
    %v1312 = vadd.f32 %v1298, %v1311
    %v1313 = vpop.f32.mrf.mxu0
    %v1314 = vadd.f32 %v1300, %v1313
    %1315 = vdwg.mxu0
    %1316 = vst [vmem:[#allocation7] sm:$0xff] %v1102
    %1317 = vst [vmem:[#allocation7 + $0x8] sm:$0xff] %v1172
    %1318 = vst [vmem:[#allocation7 + $0x10] sm:$0xff] %v1242
    %1319 = vst [vmem:[#allocation7 + $0x18] sm:$0xff] %v1312
    %1320 = vst [vmem:[#allocation7 + $0x20] sm:$0xff] %v1104
    %1321 = vst [vmem:[#allocation7 + $0x28] sm:$0xff] %v1174
    %1322 = vst [vmem:[#allocation7 + $0x30] sm:$0xff] %v1244
    %1323 = vst [vmem:[#allocation7 + $0x38] sm:$0xff] %v1314
    // Predicated region
    $region18: #{tpu_custom_call.1} parent=1 // pred_check
      _
    $region19: #{tpu_custom_call.1} parent=1 // pred_check_branch
      %1325 = sbr.rel (0) target = $region21
    $region20: #{tpu_custom_call.1} parent=1 // pred_region
      %1327 = vsyncadd [#allocation4], 0
      %s1328 = sshll.u32 [#allocation7], 4
      %s1329 = int_to_ptr.vmem [resolvable:$true] %s1328
      %s1330 = sshll.u32 %s2, 4
      %s1331 = int_to_ptr.hbm [resolvable:$true] %s1330
      %1336 = dma.vmem_to_hbm [thread:$0]  %s1329, 1024, %s1331, [#allocation4], 512, 512, 32
    $region21: #{tpu_custom_call.1} parent=1 // pred_fallthru
      _
    // Predicated region
    $region22: #{tpu_custom_call.1} parent=1 // pred_check
      _
    $region23: #{tpu_custom_call.1} parent=1 // pred_check_branch
      %1338 = sbr.rel (0) target = $region25
    $region24: #{tpu_custom_call.1} parent=1 // pred_region
      %1340 = dma.done [#allocation4], 1024
    $region25: #{tpu_custom_call.1} parent=1 // pred_fallthru
      _
    %1341 = vsyncpa [#allocation3], 1
    %1342 = vsyncpa [#allocation6], 1
    %1343 = vsyncpa [#allocation4], 1

</llo_original>
